<compile_context>
chip_gen: v7x
topology: tpu7x:2x2x1
jax: 0.10.0
libtpu: 0.0.40
codegen_flags: <defaults>
</compile_context>

<pallas_src>
import jax
import jax.numpy as jnp
from jax import lax
from jax.experimental import pallas as pl
from jax.experimental.pallas import tpu as pltpu

# TODO(synk): Tree.num_sem comes from an external Tree class in the original
# codebase; fixed here as a constant.
NUM_SEM = 10

GN_EPS = 1e-5


def _round_up(x, m):
    return (x + m - 1) // m * m


def make_add_child_decoder_kernel(feature_size, num_sem, num_groups):
    F = feature_size
    S = num_sem
    G = num_groups
    gs = F // G
    inv_gs = 1.0 / float(gs)

    def kernel(x_ref, wp_ref, bp_ref, w2_ref, b2_ref, gamma_ref, beta_ref,
               m_ref, mt_ref, child_ref, sem_ref, exists_ref):
        x = x_ref[...]                                              # (TB, F)

        # mlp_parent slice for this child: relu(x @ Wp[c] + bp[c]) -> (TB, H)
        enc = jnp.dot(x, wp_ref[0],
                      preferred_element_type=jnp.float32) + bp_ref[0]
        enc = jnp.maximum(enc, 0.0)

        # Fused second layer: [mlp_child | mlp_sem | mlp_exists] -> (TB, F+S+1)
        y2 = jnp.dot(enc, w2_ref[...],
                     preferred_element_type=jnp.float32) + b2_ref[...]
        child_pre = y2[:, :F]                                       # (TB, F)
        sem = y2[:, F:F + S]                                        # (TB, S)
        exists = y2[:, F + S:]                                      # (TB, 1)

        # GroupNorm(F channels, G groups) via matmul statistics (lane-dense,
        # no in-kernel lane-splitting reshape). Two-pass mean/var like PyTorch.
        m = m_ref[...]                                              # (F, G)
        mt = mt_ref[...]                                            # (G, F)
        gmean = jnp.dot(child_pre, m,
                        preferred_element_type=jnp.float32) * inv_gs        # (TB, G)
        mean_full = jnp.dot(gmean, mt, preferred_element_type=jnp.float32)  # (TB, F)
        centered = child_pre - mean_full
        gvar = jnp.dot(centered * centered, m,
                       preferred_element_type=jnp.float32) * inv_gs         # (TB, G)
        rstd_full = jnp.dot(lax.rsqrt(gvar + GN_EPS), mt,
                            preferred_element_type=jnp.float32)             # (TB, F)
        child = centered * rstd_full * gamma_ref[...] + beta_ref[...]
        child = jnp.maximum(child, 0.0)

        child_ref[0] = child
        sem_ref[0] = sem
        exists_ref[0] = exists

    return kernel


def add_child_decoder_forward(x, params, *, max_child_num, num_sem=NUM_SEM,
                              block_b=None):
    """x: (B, F) float32. params: dict of transposed weights / (1, n) biases."""
    B, F = x.shape
    C = max_child_num
    H = params["wp"].shape[1] // C
    S = num_sem
    G = min(32, F // 8)
    gs = F // G
    D2 = F + S + 1

    # Batch tile (multiple of 8); pad batch if needed.
    TB = block_b if block_b is not None else min(256, _round_up(B, 8))
    TB = _round_up(min(TB, _round_up(B, 8)), 8)
    Bp = _round_up(B, TB)
    if Bp != B:
        x = jnp.pad(x, ((0, Bp - B), (0, 0)))
    nb = Bp // TB

    # Parameter rearrangement / fusion (done once, outside the kernel).
    wp_r = params["wp"].reshape(F, C, H).transpose(1, 0, 2)            # (C, F, H)
    bp_r = params["bp"].reshape(C, 1, H)                               # (C, 1, H)
    w2 = jnp.concatenate([params["wc"], params["ws"], params["we"]], axis=1)  # (H, D2)
    b2 = jnp.concatenate([params["bc"], params["bs"], params["be"]], axis=1)  # (1, D2)
    gamma = params["gamma"].reshape(1, F)
    beta = params["beta"].reshape(1, F)
    group_ids = jnp.arange(F, dtype=jnp.int32) // gs
    m = (group_ids[:, None] == jnp.arange(G, dtype=jnp.int32)[None, :]
         ).astype(jnp.float32)                                         # (F, G)
    mt = m.T                                                           # (G, F)

    kernel = make_add_child_decoder_kernel(F, S, G)

    cost = pl.CostEstimate(
        flops=int(2 * Bp * C * (F * H + H * D2 + 4 * F * G)),
        transcendentals=int(Bp * C * G),
        bytes_accessed=int(4 * (Bp * F + C * F * H + C * H + H * D2 + D2
                                + 4 * F + 2 * F * G + C * Bp * (F + S + 1))),
    )

    child_t, sem_t, exists_t = pl.pallas_call(
        kernel,
        grid=(nb, C),
        in_specs=[
            pl.BlockSpec((TB, F), lambda i, c: (i, 0)),        # x (resident per tile)
            pl.BlockSpec((1, F, H), lambda i, c: (c, 0, 0)),   # Wp per-child slice
            pl.BlockSpec((1, 1, H), lambda i, c: (c, 0, 0)),   # bp per-child slice
            pl.BlockSpec((H, D2), lambda i, c: (0, 0)),        # fused W2 (resident)
            pl.BlockSpec((1, D2), lambda i, c: (0, 0)),        # fused b2
            pl.BlockSpec((1, F), lambda i, c: (0, 0)),         # gamma
            pl.BlockSpec((1, F), lambda i, c: (0, 0)),         # beta
            pl.BlockSpec((F, G), lambda i, c: (0, 0)),         # group one-hot
            pl.BlockSpec((G, F), lambda i, c: (0, 0)),         # its transpose
        ],
        out_specs=[
            pl.BlockSpec((1, TB, F), lambda i, c: (c, i, 0)),
            pl.BlockSpec((1, TB, S), lambda i, c: (c, i, 0)),
            pl.BlockSpec((1, TB, 1), lambda i, c: (c, i, 0)),
        ],
        out_shape=[
            jax.ShapeDtypeStruct((C, Bp, F), jnp.float32),
            jax.ShapeDtypeStruct((C, Bp, S), jnp.float32),
            jax.ShapeDtypeStruct((C, Bp, 1), jnp.float32),
        ],
        compiler_params=pltpu.CompilerParams(
            dimension_semantics=("parallel", "parallel"),
            vmem_limit_bytes=48 * 1024 * 1024,
        ),
        cost_estimate=cost,
    )(x, wp_r, bp_r, w2, b2, gamma, beta, m, mt)

    child_feats = jnp.transpose(child_t, (1, 0, 2))[:B]
    child_sem_logits = jnp.transpose(sem_t, (1, 0, 2))[:B]
    child_exists_logits = jnp.transpose(exists_t, (1, 0, 2))[:B]
    return child_feats, child_sem_logits, child_exists_logits


def init_params(key, feature_size, hidden_size, max_child_num, num_sem=NUM_SEM):
    """PyTorch-style Linear init, weights stored transposed as (in, out)."""
    F, H, C, S = feature_size, hidden_size, max_child_num, num_sem
    ks = jax.random.split(key, 10)
    s1 = 1.0 / jnp.sqrt(F)
    s2 = 1.0 / jnp.sqrt(H)
    u = jax.random.uniform
    return {
        "wp": u(ks[0], (F, H * C), jnp.float32, -s1, s1),   # mlp_parent
        "bp": u(ks[1], (1, H * C), jnp.float32, -s1, s1),
        "we": u(ks[2], (H, 1), jnp.float32, -s2, s2),       # mlp_exists
        "be": u(ks[3], (1, 1), jnp.float32, -s2, s2),
        "ws": u(ks[4], (H, S), jnp.float32, -s2, s2),       # mlp_sem
        "bs": u(ks[5], (1, S), jnp.float32, -s2, s2),
        "wc": u(ks[6], (H, F), jnp.float32, -s2, s2),       # mlp_child
        "bc": u(ks[7], (1, F), jnp.float32, -s2, s2),
        "gamma": 1.0 + 0.1 * jax.random.normal(ks[8], (F,), jnp.float32),
        "beta": 0.1 * jax.random.normal(ks[9], (F,), jnp.float32),
    }


def reference_forward(x, params, *, max_child_num, num_sem=NUM_SEM):
    """Pure-JAX reference mirroring the PyTorch module."""
    B, F = x.shape
    C = max_child_num
    H = params["wp"].shape[1] // C
    S = num_sem
    enc = jnp.maximum(x @ params["wp"] + params["bp"], 0.0)            # (B, C*H)
    enc2 = enc.reshape(B * C, H)
    exists = (enc2 @ params["we"] + params["be"]).reshape(B, C, 1)
    sem = (enc2 @ params["ws"] + params["bs"]).reshape(B, C, S)
    child = enc2 @ params["wc"] + params["bc"]                         # (B*C, F)
    G = min(32, F // 8)
    cg = child.reshape(B * C, G, F // G)
    mean = cg.mean(axis=-1, keepdims=True)
    var = ((cg - mean) ** 2).mean(axis=-1, keepdims=True)
    cn = ((cg - mean) / jnp.sqrt(var + GN_EPS)).reshape(B * C, F)
    cn = cn * params["gamma"][None, :] + params["beta"][None, :]
    child_feats = jnp.maximum(cn, 0.0).reshape(B, C, F)
    return child_feats, sem, exists


if __name__ == "__main__":
    feature_size = 32
    hidden_size = 32
    max_child_num = 8
    batch = 16

    key = jax.random.PRNGKey(0)
    k_x, k_p = jax.random.split(key)
    x = jax.random.normal(k_x, (batch, feature_size), jnp.float32)
    params = init_params(k_p, feature_size, hidden_size, max_child_num)

    out = add_child_decoder_forward(x, params, max_child_num=max_child_num,
                                    block_b=8)
    out = jax.block_until_ready(out)
    child_feats, child_sem_logits, child_exists_logits = out

    ref = reference_forward(x, params, max_child_num=max_child_num)

    assert child_feats.shape == (batch, max_child_num, feature_size)
    assert child_sem_logits.shape == (batch, max_child_num, NUM_SEM)
    assert child_exists_logits.shape == (batch, max_child_num, 1)
    for got, exp in zip(out, ref):
        assert jnp.allclose(got, exp, atol=1e-4, rtol=1e-4), "mismatch vs reference"

    print("KERNEL_OK")
</pallas_src>

<mosaic_0001>
module attributes {stable_mosaic.version = 11 : i64} {
  func.func @kernel(%arg0: i32, %arg1: i32, %arg2: memref<8x32xf32, #tpu.memory_space<vmem>>, %arg3: memref<1x32x32xf32, #tpu.memory_space<vmem>>, %arg4: memref<1x1x32xf32, #tpu.memory_space<vmem>>, %arg5: memref<32x43xf32, #tpu.memory_space<vmem>>, %arg6: memref<1x43xf32, #tpu.memory_space<vmem>>, %arg7: memref<1x32xf32, #tpu.memory_space<vmem>>, %arg8: memref<1x32xf32, #tpu.memory_space<vmem>>, %arg9: memref<32x4xf32, #tpu.memory_space<vmem>>, %arg10: memref<4x32xf32, #tpu.memory_space<vmem>>, %arg11: memref<1x8x32xf32, #tpu.memory_space<vmem>>, %arg12: memref<1x8x10xf32, #tpu.memory_space<vmem>>, %arg13: memref<1x8x1xf32, #tpu.memory_space<vmem>>) attributes {dimension_semantics = [#tpu.dimension_semantics<parallel>, #tpu.dimension_semantics<parallel>], iteration_bounds = array<i64: 2, 8>, scalar_prefetch = 0 : i64, scratch_operands = 0 : i64, tpu.core_type = #tpu.core_type<tc>, window_params = [{transform_indices = @transform_0, window_bounds = array<i64: 8, 32>}, {transform_indices = @transform_1, window_bounds = array<i64: 1, 32, 32>}, {transform_indices = @transform_2, window_bounds = array<i64: 1, 1, 32>}, {pipeline_mode = #tpu.pipeline_mode<synchronous>, transform_indices = @transform_3, window_bounds = array<i64: 32, 43>}, {pipeline_mode = #tpu.pipeline_mode<synchronous>, transform_indices = @transform_4, window_bounds = array<i64: 1, 43>}, {pipeline_mode = #tpu.pipeline_mode<synchronous>, transform_indices = @transform_5, window_bounds = array<i64: 1, 32>}, {pipeline_mode = #tpu.pipeline_mode<synchronous>, transform_indices = @transform_6, window_bounds = array<i64: 1, 32>}, {pipeline_mode = #tpu.pipeline_mode<synchronous>, transform_indices = @transform_7, window_bounds = array<i64: 32, 4>}, {pipeline_mode = #tpu.pipeline_mode<synchronous>, transform_indices = @transform_8, window_bounds = array<i64: 4, 32>}, {transform_indices = @transform_9, window_bounds = array<i64: 1, 8, 32>}, {transform_indices = @transform_10, window_bounds = array<i64: 1, 8, 10>}, {transform_indices = @transform_11, window_bounds = array<i64: 1, 8, 1>}]} {
    %c0 = arith.constant 0 : index
    %c0_0 = arith.constant 0 : index
    %0 = vector.load %arg2[%c0, %c0_0] : memref<8x32xf32, #tpu.memory_space<vmem>>, vector<8x32xf32>
    %c0_1 = arith.constant 0 : index
    %c0_2 = arith.constant 0 : index
    %c0_3 = arith.constant 0 : index
    %1 = vector.load %arg3[%c0_1, %c0_2, %c0_3] : memref<1x32x32xf32, #tpu.memory_space<vmem>>, vector<1x32x32xf32>
    %2 = vector.shape_cast %1 : vector<1x32x32xf32> to vector<32x32xf32>
    %cst = arith.constant dense<0.000000e+00> : vector<8x32xf32>
    %3 = tpu.matmul %0, %2, %cst {dimension_numbers = #tpu.dot_dimension_numbers<[1], [0], [0], [1], [0, 0, 1, 1], [], []>} : vector<8x32xf32>, vector<32x32xf32>, vector<8x32xf32> -> vector<8x32xf32>
    %c0_4 = arith.constant 0 : index
    %c0_5 = arith.constant 0 : index
    %c0_6 = arith.constant 0 : index
    %4 = vector.load %arg4[%c0_4, %c0_5, %c0_6] : memref<1x1x32xf32, #tpu.memory_space<vmem>>, vector<1x1x32xf32>
    %5 = vector.shape_cast %4 : vector<1x1x32xf32> to vector<1x32xf32>
    %6 = vector.broadcast %5 : vector<1x32xf32> to vector<8x32xf32>
    %7 = arith.addf %3, %6 : vector<8x32xf32>
    %cst_7 = arith.constant 0.000000e+00 : f32
    %8 = vector.broadcast %cst_7 : f32 to vector<8x32xf32>
    %9 = arith.maximumf %7, %8 : vector<8x32xf32>
    %c0_8 = arith.constant 0 : index
    %c0_9 = arith.constant 0 : index
    %10 = vector.load %arg5[%c0_8, %c0_9] : memref<32x43xf32, #tpu.memory_space<vmem>>, vector<32x43xf32>
    %cst_10 = arith.constant dense<0.000000e+00> : vector<8x43xf32>
    %11 = tpu.matmul %9, %10, %cst_10 {dimension_numbers = #tpu.dot_dimension_numbers<[1], [0], [0], [1], [0, 0, 1, 1], [], []>} : vector<8x32xf32>, vector<32x43xf32>, vector<8x43xf32> -> vector<8x43xf32>
    %c0_11 = arith.constant 0 : index
    %c0_12 = arith.constant 0 : index
    %12 = vector.load %arg6[%c0_11, %c0_12] : memref<1x43xf32, #tpu.memory_space<vmem>>, vector<1x43xf32>
    %13 = vector.broadcast %12 : vector<1x43xf32> to vector<8x43xf32>
    %14 = arith.addf %11, %13 : vector<8x43xf32>
    %15 = vector.extract_strided_slice %14 {offsets = [0, 0], sizes = [8, 32], strides = [1, 1]} : vector<8x43xf32> to vector<8x32xf32>
    %16 = vector.extract_strided_slice %14 {offsets = [0, 32], sizes = [8, 10], strides = [1, 1]} : vector<8x43xf32> to vector<8x10xf32>
    %17 = vector.extract_strided_slice %14 {offsets = [0, 42], sizes = [8, 1], strides = [1, 1]} : vector<8x43xf32> to vector<8x1xf32>
    %c0_13 = arith.constant 0 : index
    %c0_14 = arith.constant 0 : index
    %18 = vector.load %arg9[%c0_13, %c0_14] : memref<32x4xf32, #tpu.memory_space<vmem>>, vector<32x4xf32>
    %c0_15 = arith.constant 0 : index
    %c0_16 = arith.constant 0 : index
    %19 = vector.load %arg10[%c0_15, %c0_16] : memref<4x32xf32, #tpu.memory_space<vmem>>, vector<4x32xf32>
    %cst_17 = arith.constant dense<0.000000e+00> : vector<8x4xf32>
    %20 = tpu.matmul %15, %18, %cst_17 {dimension_numbers = #tpu.dot_dimension_numbers<[1], [0], [0], [1], [0, 0, 1, 1], [], []>} : vector<8x32xf32>, vector<32x4xf32>, vector<8x4xf32> -> vector<8x4xf32>
    %cst_18 = arith.constant 1.250000e-01 : f32
    %21 = vector.broadcast %cst_18 : f32 to vector<8x4xf32>
    %22 = arith.mulf %20, %21 : vector<8x4xf32>
    %cst_19 = arith.constant dense<0.000000e+00> : vector<8x32xf32>
    %23 = tpu.matmul %22, %19, %cst_19 {dimension_numbers = #tpu.dot_dimension_numbers<[1], [0], [0], [1], [0, 0, 1, 1], [], []>} : vector<8x4xf32>, vector<4x32xf32>, vector<8x32xf32> -> vector<8x32xf32>
    %24 = arith.subf %15, %23 : vector<8x32xf32>
    %25 = arith.mulf %24, %24 : vector<8x32xf32>
    %cst_20 = arith.constant dense<0.000000e+00> : vector<8x4xf32>
    %26 = tpu.matmul %25, %18, %cst_20 {dimension_numbers = #tpu.dot_dimension_numbers<[1], [0], [0], [1], [0, 0, 1, 1], [], []>} : vector<8x32xf32>, vector<32x4xf32>, vector<8x4xf32> -> vector<8x4xf32>
    %cst_21 = arith.constant 1.250000e-01 : f32
    %27 = vector.broadcast %cst_21 : f32 to vector<8x4xf32>
    %28 = arith.mulf %26, %27 : vector<8x4xf32>
    %cst_22 = arith.constant 9.99999974E-6 : f32
    %29 = vector.broadcast %cst_22 : f32 to vector<8x4xf32>
    %30 = arith.addf %28, %29 : vector<8x4xf32>
    %31 = math.rsqrt %30 : vector<8x4xf32>
    %cst_23 = arith.constant dense<0.000000e+00> : vector<8x32xf32>
    %32 = tpu.matmul %31, %19, %cst_23 {dimension_numbers = #tpu.dot_dimension_numbers<[1], [0], [0], [1], [0, 0, 1, 1], [], []>} : vector<8x4xf32>, vector<4x32xf32>, vector<8x32xf32> -> vector<8x32xf32>
    %33 = arith.mulf %24, %32 : vector<8x32xf32>
    %c0_24 = arith.constant 0 : index
    %c0_25 = arith.constant 0 : index
    %34 = vector.load %arg7[%c0_24, %c0_25] : memref<1x32xf32, #tpu.memory_space<vmem>>, vector<1x32xf32>
    %35 = vector.broadcast %34 : vector<1x32xf32> to vector<8x32xf32>
    %36 = arith.mulf %33, %35 : vector<8x32xf32>
    %c0_26 = arith.constant 0 : index
    %c0_27 = arith.constant 0 : index
    %37 = vector.load %arg8[%c0_26, %c0_27] : memref<1x32xf32, #tpu.memory_space<vmem>>, vector<1x32xf32>
    %38 = vector.broadcast %37 : vector<1x32xf32> to vector<8x32xf32>
    %39 = arith.addf %36, %38 : vector<8x32xf32>
    %cst_28 = arith.constant 0.000000e+00 : f32
    %40 = vector.broadcast %cst_28 : f32 to vector<8x32xf32>
    %41 = arith.maximumf %39, %40 : vector<8x32xf32>
    %c0_29 = arith.constant 0 : index
    %c0_30 = arith.constant 0 : index
    %c0_31 = arith.constant 0 : index
    %42 = vector.load %arg11[%c0_29, %c0_30, %c0_31] : memref<1x8x32xf32, #tpu.memory_space<vmem>>, vector<1x8x32xf32>
    %43 = vector.shape_cast %42 : vector<1x8x32xf32> to vector<8x32xf32>
    %44 = vector.shape_cast %41 : vector<8x32xf32> to vector<1x8x32xf32>
    tpu.vector_store %arg11[%c0_29, %c0_30, %c0_31], %44 {strides = array<i32>} : memref<1x8x32xf32, #tpu.memory_space<vmem>>, vector<1x8x32xf32>,
    %c0_32 = arith.constant 0 : index
    %c0_33 = arith.constant 0 : index
    %c0_34 = arith.constant 0 : index
    %45 = vector.load %arg12[%c0_32, %c0_33, %c0_34] : memref<1x8x10xf32, #tpu.memory_space<vmem>>, vector<1x8x10xf32>
    %46 = vector.shape_cast %45 : vector<1x8x10xf32> to vector<8x10xf32>
    %47 = vector.shape_cast %16 : vector<8x10xf32> to vector<1x8x10xf32>
    tpu.vector_store %arg12[%c0_32, %c0_33, %c0_34], %47 {strides = array<i32>} : memref<1x8x10xf32, #tpu.memory_space<vmem>>, vector<1x8x10xf32>,
    %c0_35 = arith.constant 0 : index
    %c0_36 = arith.constant 0 : index
    %c0_37 = arith.constant 0 : index
    %48 = vector.load %arg13[%c0_35, %c0_36, %c0_37] : memref<1x8x1xf32, #tpu.memory_space<vmem>>, vector<1x8x1xf32>
    %49 = vector.shape_cast %48 : vector<1x8x1xf32> to vector<8x1xf32>
    %50 = vector.shape_cast %17 : vector<8x1xf32> to vector<1x8x1xf32>
    tpu.vector_store %arg13[%c0_35, %c0_36, %c0_37], %50 {strides = array<i32>} : memref<1x8x1xf32, #tpu.memory_space<vmem>>, vector<1x8x1xf32>,
    return
  }
  func.func @transform_0(%arg0: i32, %arg1: i32) -> (i32, i32) {
    %c0_i32 = arith.constant 0 : i32
    %c0_i32_0 = arith.constant 0 : i32
    return %arg0, %c0_i32 : i32, i32
  }
  func.func @transform_1(%arg0: i32, %arg1: i32) -> (i32, i32, i32) {
    %c0_i32 = arith.constant 0 : i32
    %c0_i32_0 = arith.constant 0 : i32
    %c0_i32_1 = arith.constant 0 : i32
    return %arg1, %c0_i32, %c0_i32_0 : i32, i32, i32
  }
  func.func @transform_2(%arg0: i32, %arg1: i32) -> (i32, i32, i32) {
    %c0_i32 = arith.constant 0 : i32
    %c0_i32_0 = arith.constant 0 : i32
    %c0_i32_1 = arith.constant 0 : i32
    return %arg1, %c0_i32, %c0_i32_0 : i32, i32, i32
  }
  func.func @transform_3(%arg0: i32, %arg1: i32) -> (i32, i32) {
    %c0_i32 = arith.constant 0 : i32
    %c0_i32_0 = arith.constant 0 : i32
    %c0_i32_1 = arith.constant 0 : i32
    return %c0_i32, %c0_i32_0 : i32, i32
  }
  func.func @transform_4(%arg0: i32, %arg1: i32) -> (i32, i32) {
    %c0_i32 = arith.constant 0 : i32
    %c0_i32_0 = arith.constant 0 : i32
    %c0_i32_1 = arith.constant 0 : i32
    return %c0_i32, %c0_i32_0 : i32, i32
  }
  func.func @transform_5(%arg0: i32, %arg1: i32) -> (i32, i32) {
    %c0_i32 = arith.constant 0 : i32
    %c0_i32_0 = arith.constant 0 : i32
    %c0_i32_1 = arith.constant 0 : i32
    return %c0_i32, %c0_i32_0 : i32, i32
  }
  func.func @transform_6(%arg0: i32, %arg1: i32) -> (i32, i32) {
    %c0_i32 = arith.constant 0 : i32
    %c0_i32_0 = arith.constant 0 : i32
    %c0_i32_1 = arith.constant 0 : i32
    return %c0_i32, %c0_i32_0 : i32, i32
  }
  func.func @transform_7(%arg0: i32, %arg1: i32) -> (i32, i32) {
    %c0_i32 = arith.constant 0 : i32
    %c0_i32_0 = arith.constant 0 : i32
    %c0_i32_1 = arith.constant 0 : i32
    return %c0_i32, %c0_i32_0 : i32, i32
  }
  func.func @transform_8(%arg0: i32, %arg1: i32) -> (i32, i32) {
    %c0_i32 = arith.constant 0 : i32
    %c0_i32_0 = arith.constant 0 : i32
    %c0_i32_1 = arith.constant 0 : i32
    return %c0_i32, %c0_i32_0 : i32, i32
  }
  func.func @transform_9(%arg0: i32, %arg1: i32) -> (i32, i32, i32) {
    %c0_i32 = arith.constant 0 : i32
    %c0_i32_0 = arith.constant 0 : i32
    return %arg1, %arg0, %c0_i32 : i32, i32, i32
  }
  func.func @transform_10(%arg0: i32, %arg1: i32) -> (i32, i32, i32) {
    %c0_i32 = arith.constant 0 : i32
    %c0_i32_0 = arith.constant 0 : i32
    return %arg1, %arg0, %c0_i32 : i32, i32, i32
  }
  func.func @transform_11(%arg0: i32, %arg1: i32) -> (i32, i32, i32) {
    %c0_i32 = arith.constant 0 : i32
    %c0_i32_0 = arith.constant 0 : i32
    return %arg1, %arg0, %c0_i32 : i32, i32, i32
  }
}

</mosaic_0001>

<llo_original>
// kernel: tpu_custom_call.1
$region0: #{tpu_custom_call.1}
  #allocation0 [shape = 'u32[]', space=smem, size = 0x4, offset = 0x4, fixed_abs, tag = 'smem constant byte address 0x4 - core index']
  #allocation1 [shape = 'u32[144,128]{1,0:T(1,128)}', space=vmem, size = 0x12000, scoped, tag = 'internal scratch']
  %s0 = inlined_call_operand.hbm [shape: f32[16,32], index: 0, kind: input, shape index: {}]
  %s1 = inlined_call_operand.hbm [shape: f32[8,32,32], index: 1, kind: input, shape index: {}]
  %s2 = inlined_call_operand.vmem [shape: f32[8,1,32], index: 2, kind: input, shape index: {}]
  %s3 = inlined_call_operand.vmem [shape: f32[32,43], index: 3, kind: input, shape index: {}]
  %s4 = inlined_call_operand.vmem [shape: f32[1,43], index: 4, kind: input, shape index: {}]
  %s5 = inlined_call_operand.vmem [shape: f32[1,32], index: 5, kind: input, shape index: {}]
  %s6 = inlined_call_operand.vmem [shape: f32[1,32], index: 6, kind: input, shape index: {}]
  %s7 = inlined_call_operand.vmem [shape: f32[32,4], index: 7, kind: input, shape index: {}]
  %s8 = inlined_call_operand.vmem [shape: f32[4,32], index: 8, kind: input, shape index: {}]
  %s9 = inlined_call_operand.hbm [shape: f32[8,16,32], index: 9, kind: output, shape index: {0}]
  %s10 = inlined_call_operand.vmem [shape: f32[8,16,10], index: 10, kind: output, shape index: {1}]
  %s11 = inlined_call_operand.vmem [shape: f32[8,16,1], index: 11, kind: output, shape index: {2}]
  %12 = xla_tuple %s9, %s10, %s11
  %s13 = sld [smem:[#allocation0]]
  $region93: #{tpu_custom_call.1} parent=0
    _
  %s15 = ssub.s32 1, %s13
  %s16 = scalar_select 0, %s15, %s13
  $region1: #{tpu_custom_call.1} parent=0
    #allocation2 [shape = 'u8[8192]{0}', space=vmem, size = 0x2000, scoped, tag = 'input window, operand 0']
    #allocation3 [shape = 's32[2]{0}', space=sflag, size = 0x8, scoped, tag = 'scoped memory for tpu_custom_call.1']
    #allocation4 [shape = 's32[2]{0}', space=sflag, size = 0x8, scoped, tag = 'scoped memory for tpu_custom_call.1']
    #allocation5 [shape = 'u8[32768]{0}', space=vmem, size = 0x8000, scoped, tag = 'input window, operand 1']
    #allocation6 [shape = 's32[2]{0}', space=sflag, size = 0x8, scoped, tag = 'scoped memory for tpu_custom_call.1']
    #allocation7 [shape = 'u8[8192]{0}', space=vmem, size = 0x2000, scoped, tag = 'output window, operand 0']
    %17 = vsyncpa [#allocation3], 0
    %s18 = scalar_lea.sflag [#allocation3], 1
    %19 = vsyncpa %s18, 0
    %20 = vsyncpa [#allocation6], 0
    %s21 = scalar_lea.sflag [#allocation6], 1
    %22 = vsyncpa %s21, 0
    %23 = vsyncpa [#allocation4], 0
    %s24 = scalar_lea.sflag [#allocation4], 1
    %25 = vsyncpa %s24, 0
    loop: start=0, step=1, limit=18
    $region2: #{tpu_custom_call.1} parent=1 // loop_pre_header
      _
    $region3: #{tpu_custom_call.1} parent=1 // loop_header
      %s27 = sphi 0, %s31
      %p28 = scmp.ge.s32.totalorder %s27, 18
      %s34 = sphi 0, %s46
      %s35 = sphi 0, %s42
      %s36 = sphi 0, %s34
      %s37 = sphi 0, %s35
      %s38 = sphi 0, %s36
      %s39 = sphi 0, %s37
      %s49 = sphi 0, %s51
      %s52 = sphi 0, %s49
      %s53 = sphi 0, %s52
      %s69 = sphi 0, %s53
      %s75 = sphi 0, %s77
      %s78 = sphi 0, %s75
      %s79 = sphi 0, %s78
      %s95 = sphi 0, %s79
      %s101 = sphi 0, %s103
      %s104 = sphi 0, %s101
      %s105 = sphi 0, %s104
      %s121 = sphi 0, %s105
      %s125 = sphi 0, %s125
      %s127 = sphi 0, %s125
      %s128 = sphi 0, %s127
      %s142 = sphi 0, %s128
      %s146 = sphi 0, %s146
      %s148 = sphi 0, %s146
      %s149 = sphi 0, %s148
      %s163 = sphi 0, %s149
      %s167 = sphi 0, %s167
      %s169 = sphi 0, %s167
      %s170 = sphi 0, %s169
      %s184 = sphi 0, %s170
      %s188 = sphi 0, %s188
      %s190 = sphi 0, %s188
      %s191 = sphi 0, %s190
      %s205 = sphi 0, %s191
      %s209 = sphi 0, %s209
      %s211 = sphi 0, %s209
      %s212 = sphi 0, %s211
      %s226 = sphi 0, %s212
      %s230 = sphi 0, %s230
      %s232 = sphi 0, %s230
      %s233 = sphi 0, %s232
      %s247 = sphi 0, %s233
      %s255 = sphi 0, %s257
      %s258 = sphi 0, %s255
      %s259 = sphi 0, %s258
      %s275 = sphi 0, %s259
      %s283 = sphi 0, %s285
      %s286 = sphi 0, %s283
      %s287 = sphi 0, %s286
      %s303 = sphi 0, %s287
      %s311 = sphi 0, %s313
      %s314 = sphi 0, %s311
      %s315 = sphi 0, %s314
      %s331 = sphi 0, %s315
    $region4: #{tpu_custom_call.1} parent=1 // loop_header_branch
      %30 = sbr.rel (%p28) target = $region8
    $region5: #{tpu_custom_call.1} parent=1 // loop_body
      %s32 = ssub.s32 %s27, 1
      %s33 = ssub.s32 %s27, 2
      %s40 = sadd.s32 1, %s35
      %p41 = scmp.ge.s32.totalorder %s40, 8
      %s42 = scalar_select %p41, 0, %s40
      %s43 = sadd.s32 1, %s34
      %s44 = scalar_select %p41, %s43, %s34
      %p45 = scmp.ge.s32.totalorder %s44, 2
      %s46 = scalar_select %p45, 0, %s44
      %s47 = ssub.s32 %s34, %s46
      %p48 = scmp.eq.s32.totalorder %s47, 0
      %s50 = sadd.s32 %s49, 1
      %s51 = scalar_select %p48, %s49, %s50
      %p54 = pneg %p48
      %p55 = scmp.eq.s32.totalorder %s27, 15
      %p56 = por %p54, %p55
      %p57 = scmp.ne.s32.totalorder %s49, %s52
      %p58 = scmp.eq.s32.totalorder %s27, 0
      %p59 = por %p57, %p58
      %p60 = scmp.ne.s32.totalorder %s49, %s52
      %p61 = scmp.eq.s32.totalorder %s32, 15
      %p62 = por %p60, %p61
      %p63 = scmp.ne.s32.totalorder %s52, %s53
      %p64 = scmp.eq.s32.totalorder %s32, 0
      %p65 = por %p63, %p64
      %p66 = scmp.ne.s32.totalorder %s52, %s53
      %p67 = scmp.eq.s32.totalorder %s33, 15
      %p68 = por %p66, %p67
      %p70 = scmp.ne.s32.totalorder %s53, %s69
      %p71 = scmp.eq.s32.totalorder %s33, 0
      %p72 = por %p70, %p71
      %s73 = ssub.s32 %s35, %s42
      %p74 = scmp.eq.s32.totalorder %s73, 0
      %s76 = sadd.s32 %s75, 1
      %s77 = scalar_select %p74, %s75, %s76
      %p80 = pneg %p74
      %p81 = scmp.eq.s32.totalorder %s27, 15
      %p82 = por %p80, %p81
      %p83 = scmp.ne.s32.totalorder %s75, %s78
      %p84 = scmp.eq.s32.totalorder %s27, 0
      %p85 = por %p83, %p84
      %p86 = scmp.ne.s32.totalorder %s75, %s78
      %p87 = scmp.eq.s32.totalorder %s32, 15
      %p88 = por %p86, %p87
      %p89 = scmp.ne.s32.totalorder %s78, %s79
      %p90 = scmp.eq.s32.totalorder %s32, 0
      %p91 = por %p89, %p90
      %p92 = scmp.ne.s32.totalorder %s78, %s79
      %p93 = scmp.eq.s32.totalorder %s33, 15
      %p94 = por %p92, %p93
      %p96 = scmp.ne.s32.totalorder %s79, %s95
      %p97 = scmp.eq.s32.totalorder %s33, 0
      %p98 = por %p96, %p97
      %s99 = ssub.s32 %s35, %s42
      %p100 = scmp.eq.s32.totalorder %s99, 0
      %s102 = sadd.s32 %s101, 1
      %s103 = scalar_select %p100, %s101, %s102
      %p106 = pneg %p100
      %p107 = scmp.eq.s32.totalorder %s27, 15
      %p108 = por %p106, %p107
      %p109 = scmp.ne.s32.totalorder %s101, %s104
      %p110 = scmp.eq.s32.totalorder %s27, 0
      %p111 = por %p109, %p110
      %p112 = scmp.ne.s32.totalorder %s101, %s104
      %p113 = scmp.eq.s32.totalorder %s32, 15
      %p114 = por %p112, %p113
      %p115 = scmp.ne.s32.totalorder %s104, %s105
      %p116 = scmp.eq.s32.totalorder %s32, 0
      %p117 = por %p115, %p116
      %p118 = scmp.ne.s32.totalorder %s104, %s105
      %p119 = scmp.eq.s32.totalorder %s33, 15
      %p120 = por %p118, %p119
      %p122 = scmp.ne.s32.totalorder %s105, %s121
      %p123 = scmp.eq.s32.totalorder %s33, 0
      %p124 = por %p122, %p123
      %s126 = sadd.s32 %s125, 1
      %p129 = scmp.eq.s32.totalorder %s27, 15
      %p130 = scmp.ne.s32.totalorder %s125, %s127
      %p131 = scmp.eq.s32.totalorder %s27, 0
      %p132 = por %p130, %p131
      %p133 = scmp.ne.s32.totalorder %s125, %s127
      %p134 = scmp.eq.s32.totalorder %s32, 15
      %p135 = por %p133, %p134
      %p136 = scmp.ne.s32.totalorder %s127, %s128
      %p137 = scmp.eq.s32.totalorder %s32, 0
      %p138 = por %p136, %p137
      %p139 = scmp.ne.s32.totalorder %s127, %s128
      %p140 = scmp.eq.s32.totalorder %s33, 15
      %p141 = por %p139, %p140
      %p143 = scmp.ne.s32.totalorder %s128, %s142
      %p144 = scmp.eq.s32.totalorder %s33, 0
      %p145 = por %p143, %p144
      %s147 = sadd.s32 %s146, 1
      %p150 = scmp.eq.s32.totalorder %s27, 15
      %p151 = scmp.ne.s32.totalorder %s146, %s148
      %p152 = scmp.eq.s32.totalorder %s27, 0
      %p153 = por %p151, %p152
      %p154 = scmp.ne.s32.totalorder %s146, %s148
      %p155 = scmp.eq.s32.totalorder %s32, 15
      %p156 = por %p154, %p155
      %p157 = scmp.ne.s32.totalorder %s148, %s149
      %p158 = scmp.eq.s32.totalorder %s32, 0
      %p159 = por %p157, %p158
      %p160 = scmp.ne.s32.totalorder %s148, %s149
      %p161 = scmp.eq.s32.totalorder %s33, 15
      %p162 = por %p160, %p161
      %p164 = scmp.ne.s32.totalorder %s149, %s163
      %p165 = scmp.eq.s32.totalorder %s33, 0
      %p166 = por %p164, %p165
      %s168 = sadd.s32 %s167, 1
      %p171 = scmp.eq.s32.totalorder %s27, 15
      %p172 = scmp.ne.s32.totalorder %s167, %s169
      %p173 = scmp.eq.s32.totalorder %s27, 0
      %p174 = por %p172, %p173
      %p175 = scmp.ne.s32.totalorder %s167, %s169
      %p176 = scmp.eq.s32.totalorder %s32, 15
      %p177 = por %p175, %p176
      %p178 = scmp.ne.s32.totalorder %s169, %s170
      %p179 = scmp.eq.s32.totalorder %s32, 0
      %p180 = por %p178, %p179
      %p181 = scmp.ne.s32.totalorder %s169, %s170
      %p182 = scmp.eq.s32.totalorder %s33, 15
      %p183 = por %p181, %p182
      %p185 = scmp.ne.s32.totalorder %s170, %s184
      %p186 = scmp.eq.s32.totalorder %s33, 0
      %p187 = por %p185, %p186
      %s189 = sadd.s32 %s188, 1
      %p192 = scmp.eq.s32.totalorder %s27, 15
      %p193 = scmp.ne.s32.totalorder %s188, %s190
      %p194 = scmp.eq.s32.totalorder %s27, 0
      %p195 = por %p193, %p194
      %p196 = scmp.ne.s32.totalorder %s188, %s190
      %p197 = scmp.eq.s32.totalorder %s32, 15
      %p198 = por %p196, %p197
      %p199 = scmp.ne.s32.totalorder %s190, %s191
      %p200 = scmp.eq.s32.totalorder %s32, 0
      %p201 = por %p199, %p200
      %p202 = scmp.ne.s32.totalorder %s190, %s191
      %p203 = scmp.eq.s32.totalorder %s33, 15
      %p204 = por %p202, %p203
      %p206 = scmp.ne.s32.totalorder %s191, %s205
      %p207 = scmp.eq.s32.totalorder %s33, 0
      %p208 = por %p206, %p207
      %s210 = sadd.s32 %s209, 1
      %p213 = scmp.eq.s32.totalorder %s27, 15
      %p214 = scmp.ne.s32.totalorder %s209, %s211
      %p215 = scmp.eq.s32.totalorder %s27, 0
      %p216 = por %p214, %p215
      %p217 = scmp.ne.s32.totalorder %s209, %s211
      %p218 = scmp.eq.s32.totalorder %s32, 15
      %p219 = por %p217, %p218
      %p220 = scmp.ne.s32.totalorder %s211, %s212
      %p221 = scmp.eq.s32.totalorder %s32, 0
      %p222 = por %p220, %p221
      %p223 = scmp.ne.s32.totalorder %s211, %s212
      %p224 = scmp.eq.s32.totalorder %s33, 15
      %p225 = por %p223, %p224
      %p227 = scmp.ne.s32.totalorder %s212, %s226
      %p228 = scmp.eq.s32.totalorder %s33, 0
      %p229 = por %p227, %p228
      %s231 = sadd.s32 %s230, 1
      %p234 = scmp.eq.s32.totalorder %s27, 15
      %p235 = scmp.ne.s32.totalorder %s230, %s232
      %p236 = scmp.eq.s32.totalorder %s27, 0
      %p237 = por %p235, %p236
      %p238 = scmp.ne.s32.totalorder %s230, %s232
      %p239 = scmp.eq.s32.totalorder %s32, 15
      %p240 = por %p238, %p239
      %p241 = scmp.ne.s32.totalorder %s232, %s233
      %p242 = scmp.eq.s32.totalorder %s32, 0
      %p243 = por %p241, %p242
      %p244 = scmp.ne.s32.totalorder %s232, %s233
      %p245 = scmp.eq.s32.totalorder %s33, 15
      %p246 = por %p244, %p245
      %p248 = scmp.ne.s32.totalorder %s233, %s247
      %p249 = scmp.eq.s32.totalorder %s33, 0
      %p250 = por %p248, %p249
      %s251 = ssub.s32 %s35, %s42
      %s252 = ssub.s32 %s34, %s46
      %s253 = sor.u32 %s251, %s252
      %p254 = scmp.eq.s32.totalorder %s253, 0
      %s256 = sadd.s32 %s255, 1
      %s257 = scalar_select %p254, %s255, %s256
      %p260 = pneg %p254
      %p261 = scmp.eq.s32.totalorder %s27, 15
      %p262 = por %p260, %p261
      %p263 = scmp.ne.s32.totalorder %s255, %s258
      %p264 = scmp.eq.s32.totalorder %s27, 0
      %p265 = por %p263, %p264
      %p266 = scmp.ne.s32.totalorder %s255, %s258
      %p267 = scmp.eq.s32.totalorder %s32, 15
      %p268 = por %p266, %p267
      %p269 = scmp.ne.s32.totalorder %s258, %s259
      %p270 = scmp.eq.s32.totalorder %s32, 0
      %p271 = por %p269, %p270
      %p272 = scmp.ne.s32.totalorder %s258, %s259
      %p273 = scmp.eq.s32.totalorder %s33, 15
      %p274 = por %p272, %p273
      %p276 = scmp.ne.s32.totalorder %s259, %s275
      %p277 = scmp.eq.s32.totalorder %s33, 0
      %p278 = por %p276, %p277
      %s279 = ssub.s32 %s35, %s42
      %s280 = ssub.s32 %s34, %s46
      %s281 = sor.u32 %s279, %s280
      %p282 = scmp.eq.s32.totalorder %s281, 0
      %s284 = sadd.s32 %s283, 1
      %s285 = scalar_select %p282, %s283, %s284
      %p288 = pneg %p282
      %p289 = scmp.eq.s32.totalorder %s27, 15
      %p290 = por %p288, %p289
      %p291 = scmp.ne.s32.totalorder %s283, %s286
      %p292 = scmp.eq.s32.totalorder %s27, 0
      %p293 = por %p291, %p292
      %p294 = scmp.ne.s32.totalorder %s283, %s286
      %p295 = scmp.eq.s32.totalorder %s32, 15
      %p296 = por %p294, %p295
      %p297 = scmp.ne.s32.totalorder %s286, %s287
      %p298 = scmp.eq.s32.totalorder %s32, 0
      %p299 = por %p297, %p298
      %p300 = scmp.ne.s32.totalorder %s286, %s287
      %p301 = scmp.eq.s32.totalorder %s33, 15
      %p302 = por %p300, %p301
      %p304 = scmp.ne.s32.totalorder %s287, %s303
      %p305 = scmp.eq.s32.totalorder %s33, 0
      %p306 = por %p304, %p305
      %s307 = ssub.s32 %s35, %s42
      %s308 = ssub.s32 %s34, %s46
      %s309 = sor.u32 %s307, %s308
      %p310 = scmp.eq.s32.totalorder %s309, 0
      %s312 = sadd.s32 %s311, 1
      %s313 = scalar_select %p310, %s311, %s312
      %p316 = pneg %p310
      %p317 = scmp.eq.s32.totalorder %s27, 15
      %p318 = por %p316, %p317
      %p319 = scmp.ne.s32.totalorder %s311, %s314
      %p320 = scmp.eq.s32.totalorder %s27, 0
      %p321 = por %p319, %p320
      %p322 = scmp.ne.s32.totalorder %s311, %s314
      %p323 = scmp.eq.s32.totalorder %s32, 15
      %p324 = por %p322, %p323
      %p325 = scmp.ne.s32.totalorder %s314, %s315
      %p326 = scmp.eq.s32.totalorder %s32, 0
      %p327 = por %p325, %p326
      %p328 = scmp.ne.s32.totalorder %s314, %s315
      %p329 = scmp.eq.s32.totalorder %s33, 15
      %p330 = por %p328, %p329
      %p332 = scmp.ne.s32.totalorder %s315, %s331
      %p333 = scmp.eq.s32.totalorder %s33, 0
      %p334 = por %p332, %p333
      %p335 = scmp.le.s32.totalorder 1, %s27
      %p336 = scmp.lt.s32.totalorder %s27, 17
      %p337 = pnand %p335, %p336
      %p338 = pneg %p337
      // Predicated region
      $region9: #{tpu_custom_call.1} parent=5 // pred_check
        _
      $region10: #{tpu_custom_call.1} parent=5 // pred_check_branch
        %340 = sbr.rel (%p337) target = $region12
      $region11: #{tpu_custom_call.1} parent=5 // pred_region
        %s341 = ssub.s32 %s27, 1
        // Predicated region
        $region13: #{tpu_custom_call.1} parent=11 // pred_check
          %p342 = pneg %p138
        $region14: #{tpu_custom_call.1} parent=11 // pred_check_branch
          %344 = sbr.rel (%p342) target = $region16
        $region15: #{tpu_custom_call.1} parent=11 // pred_region
          _
        $region16: #{tpu_custom_call.1} parent=11 // pred_fallthru
          _
        // Predicated region
        $region17: #{tpu_custom_call.1} parent=11 // pred_check
          %p345 = pneg %p159
        $region18: #{tpu_custom_call.1} parent=11 // pred_check_branch
          %347 = sbr.rel (%p345) target = $region20
        $region19: #{tpu_custom_call.1} parent=11 // pred_region
          _
        $region20: #{tpu_custom_call.1} parent=11 // pred_fallthru
          _
        // Predicated region
        $region21: #{tpu_custom_call.1} parent=11 // pred_check
          %p348 = pneg %p180
        $region22: #{tpu_custom_call.1} parent=11 // pred_check_branch
          %350 = sbr.rel (%p348) target = $region24
        $region23: #{tpu_custom_call.1} parent=11 // pred_region
          _
        $region24: #{tpu_custom_call.1} parent=11 // pred_fallthru
          _
        // Predicated region
        $region25: #{tpu_custom_call.1} parent=11 // pred_check
          %p351 = pneg %p201
        $region26: #{tpu_custom_call.1} parent=11 // pred_check_branch
          %353 = sbr.rel (%p351) target = $region28
        $region27: #{tpu_custom_call.1} parent=11 // pred_region
          _
        $region28: #{tpu_custom_call.1} parent=11 // pred_fallthru
          _
        // Predicated region
        $region29: #{tpu_custom_call.1} parent=11 // pred_check
          %p354 = pneg %p222
        $region30: #{tpu_custom_call.1} parent=11 // pred_check_branch
          %356 = sbr.rel (%p354) target = $region32
        $region31: #{tpu_custom_call.1} parent=11 // pred_region
          _
        $region32: #{tpu_custom_call.1} parent=11 // pred_fallthru
          _
        // Predicated region
        $region33: #{tpu_custom_call.1} parent=11 // pred_check
          %p357 = pneg %p243
        $region34: #{tpu_custom_call.1} parent=11 // pred_check_branch
          %359 = sbr.rel (%p357) target = $region36
        $region35: #{tpu_custom_call.1} parent=11 // pred_region
          _
        $region36: #{tpu_custom_call.1} parent=11 // pred_fallthru
          _
      $region12: #{tpu_custom_call.1} parent=5 // pred_fallthru
        _
      %p360 = scmp.lt.s32.totalorder %s27, 16
      // Predicated region
      $region37: #{tpu_custom_call.1} parent=5 // pred_check
        %p361 = pneg %p360
      $region38: #{tpu_custom_call.1} parent=5 // pred_check_branch
        %363 = sbr.rel (%p361) target = $region40
      $region39: #{tpu_custom_call.1} parent=5 // pred_region
        // Predicated region
        $region41: #{tpu_custom_call.1} parent=39 // pred_check
          %p364 = pneg %p59
        $region42: #{tpu_custom_call.1} parent=39 // pred_check_branch
          %366 = sbr.rel (%p364) target = $region44
        $region43: #{tpu_custom_call.1} parent=39 // pred_region
          %s367 = sand.u32 %s49, 1
          %s368 = scalar_lea.sflag [#allocation3], %s367
          %s369 = sand.u32 %s49, 1
          %s370 = smul.addr %s369, 8
          %s371 = scalar_lea.vmem [#allocation2], %s370
          %s373 = ssub.s32 128, 128
          %374 = vsyncadd %s368, %s373
          %s375 = smul.addr %s34, 128
          %s376 = scalar_lea.hbm %s0, %s375
          %s378 = sshll.u32 %s371, 4
          %s379 = int_to_ptr.vmem [resolvable:$true] %s378
          %381 = dma.hbm_to_vmem [thread:$0]  %s376, 128, %s379, %s368
        $region44: #{tpu_custom_call.1} parent=39 // pred_fallthru
          _
        // Predicated region
        $region45: #{tpu_custom_call.1} parent=39 // pred_check
          %p382 = pneg %p85
        $region46: #{tpu_custom_call.1} parent=39 // pred_check_branch
          %384 = sbr.rel (%p382) target = $region48
        $region47: #{tpu_custom_call.1} parent=39 // pred_region
          %s385 = sand.u32 %s75, 1
          %s386 = scalar_lea.sflag [#allocation6], %s385
          %s387 = sand.u32 %s75, 1
          %s388 = smul.addr %s387, 32
          %s389 = scalar_lea.vmem [#allocation5], %s388
          %s391 = ssub.s32 512, 512
          %392 = vsyncadd %s386, %s391
          %s393 = smul.addr %s35, 4
          %s394 = smul.addr %s393, 128
          %s395 = scalar_lea.hbm %s1, %s394
          %s396 = sshll.u32 %s389, 4
          %s397 = int_to_ptr.vmem [resolvable:$true] %s396
          %402 = dma.hbm_to_vmem [thread:$0]  %s395, 512, %s397, %s386, 128, 128, 8
        $region48: #{tpu_custom_call.1} parent=39 // pred_fallthru
          _
        // Predicated region
        $region49: #{tpu_custom_call.1} parent=39 // pred_check
          %p403 = pneg %p111
        $region50: #{tpu_custom_call.1} parent=39 // pred_check_branch
          %405 = sbr.rel (%p403) target = $region52
        $region51: #{tpu_custom_call.1} parent=39 // pred_region
          %p406 = scmp.lt.s32.totalorder %s35, 7
          %s407 = scalar_select %p406, %s35, 7
          %s408 = scalar_lea.vmem %s2, %s407
        $region52: #{tpu_custom_call.1} parent=39 // pred_fallthru
          _
      $region40: #{tpu_custom_call.1} parent=5 // pred_fallthru
        _
      %p409 = scmp.le.s32.totalorder 1, %s27
      %p410 = scmp.lt.s32.totalorder %s27, 17
      %p411 = pnand %p409, %p410
      %p412 = pneg %p411
      // Predicated region
      $region53: #{tpu_custom_call.1} parent=5 // pred_check
        _
      $region54: #{tpu_custom_call.1} parent=5 // pred_check_branch
        %414 = sbr.rel (%p411) target = $region56
      $region55: #{tpu_custom_call.1} parent=5 // pred_region
        %s415 = ssub.s32 %s27, 1
        %s416 = sand.u32 %s52, 1
        %s417 = scalar_lea.sflag [#allocation3], %s416
        %s418 = sand.u32 %s52, 1
        %s419 = smul.addr %s418, 8
        %s420 = scalar_lea.vmem [#allocation2], %s419
        // Predicated region
        $region57: #{tpu_custom_call.1} parent=55 // pred_check
          %p421 = pneg %p65
        $region58: #{tpu_custom_call.1} parent=55 // pred_check_branch
          %423 = sbr.rel (%p421) target = $region60
        $region59: #{tpu_custom_call.1} parent=55 // pred_region
          %424 = dma.done %s417, 128
        $region60: #{tpu_custom_call.1} parent=55 // pred_fallthru
          _
        %s425 = sand.u32 %s78, 1
        %s426 = scalar_lea.sflag [#allocation6], %s425
        %s427 = sand.u32 %s78, 1
        %s428 = smul.addr %s427, 32
        %s429 = scalar_lea.vmem [#allocation5], %s428
        // Predicated region
        $region61: #{tpu_custom_call.1} parent=55 // pred_check
          %p430 = pneg %p91
        $region62: #{tpu_custom_call.1} parent=55 // pred_check_branch
          %432 = sbr.rel (%p430) target = $region64
        $region63: #{tpu_custom_call.1} parent=55 // pred_region
          %433 = dma.done %s426, 512
        $region64: #{tpu_custom_call.1} parent=55 // pred_fallthru
          _
        %s434 = sand.u32 %s52, 1
        %s435 = scalar_lea.sflag [#allocation3], %s434
        %s436 = sand.u32 %s52, 1
        %s437 = smul.addr %s436, 8
        %s438 = scalar_lea.vmem [#allocation2], %s437
        %p439 = pneg %p65
        %p440 = pneg %p62
        %s441 = sand.u32 %s78, 1
        %s442 = scalar_lea.sflag [#allocation6], %s441
        %s443 = sand.u32 %s78, 1
        %s444 = smul.addr %s443, 32
        %s445 = scalar_lea.vmem [#allocation5], %s444
        %p446 = pneg %p91
        %p447 = pneg %p88
        %p448 = scmp.lt.s32.totalorder %s37, 7
        %s449 = scalar_select %p448, %s37, 7
        %s450 = scalar_lea.vmem %s2, %s449
        %p451 = pneg %p117
        %p452 = pneg %p114
        %p453 = pneg %p138
        %p454 = pneg %p135
        %p455 = pneg %p159
        %p456 = pneg %p156
        %p457 = pneg %p180
        %p458 = pneg %p177
        %p459 = pneg %p201
        %p460 = pneg %p198
        %p461 = pneg %p222
        %p462 = pneg %p219
        %p463 = pneg %p243
        %p464 = pneg %p240
        %p465 = pneg %p271
        %p466 = pneg %p268
        %s467 = sand.u32 %s258, 1
        %s468 = scalar_lea.sflag [#allocation4], %s467
        %s469 = sand.u32 %s258, 1
        %s470 = smul.addr %s469, 8
        %s471 = scalar_lea.vmem [#allocation7], %s470
        %p472 = pneg %p299
        %p473 = pneg %p296
        %p474 = scmp.lt.s32.totalorder %s37, 7
        %s475 = scalar_select %p474, %s37, 7
        %p476 = scmp.lt.s32.totalorder %s36, 1
        %s477 = scalar_select %p476, %s36, 1
        %s478 = smul.addr %s475, 2
        %s479 = sadd.s32 %s477, %s478
        %s480 = smul.addr %s479, 8
        %s481 = scalar_lea.vmem %s10, %s480
        %p482 = pneg %p327
        %p483 = pneg %p324
        %p484 = scmp.lt.s32.totalorder %s37, 7
        %s485 = scalar_select %p484, %s37, 7
        %p486 = scmp.lt.s32.totalorder %s36, 1
        %s487 = scalar_select %p486, %s36, 1
        %s488 = smul.addr %s485, 2
        %s489 = sadd.s32 %s487, %s488
        %s490 = smul.addr %s489, 8
        %s491 = scalar_lea.vmem %s11, %s490
        %p492 = scmp.lt.s32.totalorder %s37, 7
        %s493 = scalar_select %p492, %s37, 7
        %s494 = scalar_lea.vmem %s2, %s493
        %p495 = scmp.lt.s32.totalorder %s37, 7
        %s496 = scalar_select %p495, %s37, 7
        %p497 = scmp.lt.s32.totalorder %s36, 1
        %s498 = scalar_select %p497, %s36, 1
        %s499 = smul.addr %s496, 2
        %s500 = sadd.s32 %s498, %s499
        %s501 = smul.addr %s500, 8
        %s502 = scalar_lea.vmem %s10, %s501
        %p503 = scmp.lt.s32.totalorder %s37, 7
        %s504 = scalar_select %p503, %s37, 7
        %p505 = scmp.lt.s32.totalorder %s36, 1
        %s506 = scalar_select %p505, %s36, 1
        %s507 = smul.addr %s504, 2
        %s508 = sadd.s32 %s506, %s507
        %s509 = smul.addr %s508, 8
        %s510 = scalar_lea.vmem %s11, %s509
        %v511 = vld [vmem:[%s420] sm:$0xff]
        %v512 = vld [vmem:[%s429] sm:$0xff]
        %v513 = vld [vmem:[%s429 + $0x8] sm:$0xff]
        %v514 = vld [vmem:[%s429 + $0x10] sm:$0xff]
        %v515 = vld [vmem:[%s429 + $0x18] sm:$0xff]
        %v516 = vld [vmem:[%s494] sm:$0x1]
        %v518 = vlaneseq
        %v519 = vshrl.u32 %v518, 7
        %v520 = vsub.s32 0, %v519
        %v521 = vrot.slane %v516, %v520
        %vm523 = vcmask 261120
        %v525 = vsel %vm523, %v511, 0
        %527 = vmatprep.subr.mxu0 0.0
        %528 = vmatpush1.msra.mxu0 %v512
        %529 = vmatprep.subr.mxu0 0.0
        %530 = vmatpush1.msra.mxu0 %v513
        %531 = vmatprep.subr.mxu0 0.0
        %532 = vmatpush1.msra.mxu0 %v514
        %533 = vmatprep.subr.mxu0 0.0
        %534 = vmatpush1.msra.mxu0 %v515
        %535 = vmatprep.subr.mxu0 0.0
        %536 = vmatpush1.msra.mxu0 0.0
        %537 = vmatprep.subr.mxu0 0.0
        %538 = vmatpush1.msra.mxu0 0.0
        %539 = vmatprep.subr.mxu0 0.0
        %540 = vmatpush1.msra.mxu0 0.0
        %541 = vmatprep.subr.mxu0 0.0
        %542 = vmatpush1.msra.mxu0 0.0
        %543 = vmatprep.subr.mxu0 0.0
        %544 = vmatpush1.msra.mxu0 0.0
        %545 = vmatprep.subr.mxu0 0.0
        %546 = vmatpush1.msra.mxu0 0.0
        %547 = vmatprep.subr.mxu0 0.0
        %548 = vmatpush1.msra.mxu0 0.0
        %549 = vmatprep.subr.mxu0 0.0
        %550 = vmatpush1.msra.mxu0 0.0
        %551 = vmatprep.subr.mxu0 0.0
        %552 = vmatpush1.msra.mxu0 0.0
        %553 = vmatprep.subr.mxu0 0.0
        %554 = vmatpush1.msra.mxu0 0.0
        %555 = vmatprep.subr.mxu0 0.0
        %556 = vmatpush1.msra.mxu0 0.0
        %557 = vmatprep.subr.mxu0 0.0
        %558 = vmatpush1.msra.mxu0 0.0
        %559 = vmatprep.subr.mxu0 0.0
        %560 = vmatpush1.msra.mxu0 0.0
        %561 = vmatprep.subr.mxu0 0.0
        %562 = vmatpush1.msra.mxu0 0.0
        %563 = vmatprep.subr.mxu0 0.0
        %564 = vmatpush1.msra.mxu0 0.0
        %565 = vmatprep.subr.mxu0 0.0
        %566 = vmatpush1.msra.mxu0 0.0
        %567 = vmatprep.subr.mxu0 0.0
        %568 = vmatpush1.msra.mxu0 0.0
        %569 = vmatprep.subr.mxu0 0.0
        %570 = vmatpush1.msra.mxu0 0.0
        %571 = vmatprep.subr.mxu0 0.0
        %572 = vmatpush1.msra.mxu0 0.0
        %573 = vmatprep.subr.mxu0 0.0
        %574 = vmatpush1.msra.mxu0 0.0
        %575 = vmatprep.subr.mxu0 0.0
        %576 = vmatpush1.msra.mxu0 0.0
        %577 = vmatprep.subr.mxu0 0.0
        %578 = vmatpush1.msra.mxu0 0.0
        %579 = vmatprep.subr.mxu0 0.0
        %580 = vmatpush1.msra.mxu0 0.0
        %581 = vmatprep.subr.mxu0 0.0
        %582 = vmatpush1.msra.mxu0 0.0
        %583 = vmatprep.subr.mxu0 0.0
        %584 = vmatpush1.msra.mxu0 0.0
        %585 = vmatprep.subr.mxu0 0.0
        %586 = vmatpush1.msra.mxu0 0.0
        %587 = vmatprep.subr.mxu0 0.0
        %588 = vmatpush1.msra.mxu0 0.0
        %589 = vmatprep.subr.mxu0 0.0
        %590 = vmatpush1.msra.mxu0 0.0
        %591 = vmatprep.mubr.f32.mxu0 0.0
        %592 = vmatmul.mubr.f32.gmra.mrb[0].mxu0 %v525
        %v593 = vpop.f32.mrb[0].mxu0
        %v594 = vadd.f32 %v521, %v593
        %v595 = vpop.f32.mrb[0].mxu0
        %596 = vdwg.mxu0
        %v597 = vmax.f32 %v594, 0.0
        %v598 = vld [vmem:[%s3] sm:$0xff]
        %v599 = vld [vmem:[%s3 + $0x8] sm:$0xff]
        %v600 = vld [vmem:[%s3 + $0x10] sm:$0xff]
        %v601 = vld [vmem:[%s3 + $0x18] sm:$0xff]
        %v602 = vld [vmem:[%s4] sm:$0x1]
        %v604 = vlaneseq
        %v605 = vshrl.u32 %v604, 7
        %v606 = vsub.s32 0, %v605
        %v607 = vrot.slane %v602, %v606
        %v610 = vsel %vm523, %v597, 0
        %612 = vmatprep.subr.mxu0 0.0
        %613 = vmatpush1.msra.mxu0 %v598
        %614 = vmatprep.subr.mxu0 0.0
        %615 = vmatpush1.msra.mxu0 %v599
        %616 = vmatprep.subr.mxu0 0.0
        %617 = vmatpush1.msra.mxu0 %v600
        %618 = vmatprep.subr.mxu0 0.0
        %619 = vmatpush1.msra.mxu0 %v601
        %620 = vmatprep.subr.mxu0 0.0
        %621 = vmatpush1.msra.mxu0 0.0
        %622 = vmatprep.subr.mxu0 0.0
        %623 = vmatpush1.msra.mxu0 0.0
        %624 = vmatprep.subr.mxu0 0.0
        %625 = vmatpush1.msra.mxu0 0.0
        %626 = vmatprep.subr.mxu0 0.0
        %627 = vmatpush1.msra.mxu0 0.0
        %628 = vmatprep.subr.mxu0 0.0
        %629 = vmatpush1.msra.mxu0 0.0
        %630 = vmatprep.subr.mxu0 0.0
        %631 = vmatpush1.msra.mxu0 0.0
        %632 = vmatprep.subr.mxu0 0.0
        %633 = vmatpush1.msra.mxu0 0.0
        %634 = vmatprep.subr.mxu0 0.0
        %635 = vmatpush1.msra.mxu0 0.0
        %636 = vmatprep.subr.mxu0 0.0
        %637 = vmatpush1.msra.mxu0 0.0
        %638 = vmatprep.subr.mxu0 0.0
        %639 = vmatpush1.msra.mxu0 0.0
        %640 = vmatprep.subr.mxu0 0.0
        %641 = vmatpush1.msra.mxu0 0.0
        %642 = vmatprep.subr.mxu0 0.0
        %643 = vmatpush1.msra.mxu0 0.0
        %644 = vmatprep.subr.mxu0 0.0
        %645 = vmatpush1.msra.mxu0 0.0
        %646 = vmatprep.subr.mxu0 0.0
        %647 = vmatpush1.msra.mxu0 0.0
        %648 = vmatprep.subr.mxu0 0.0
        %649 = vmatpush1.msra.mxu0 0.0
        %650 = vmatprep.subr.mxu0 0.0
        %651 = vmatpush1.msra.mxu0 0.0
        %652 = vmatprep.subr.mxu0 0.0
        %653 = vmatpush1.msra.mxu0 0.0
        %654 = vmatprep.subr.mxu0 0.0
        %655 = vmatpush1.msra.mxu0 0.0
        %656 = vmatprep.subr.mxu0 0.0
        %657 = vmatpush1.msra.mxu0 0.0
        %658 = vmatprep.subr.mxu0 0.0
        %659 = vmatpush1.msra.mxu0 0.0
        %660 = vmatprep.subr.mxu0 0.0
        %661 = vmatpush1.msra.mxu0 0.0
        %662 = vmatprep.subr.mxu0 0.0
        %663 = vmatpush1.msra.mxu0 0.0
        %664 = vmatprep.subr.mxu0 0.0
        %665 = vmatpush1.msra.mxu0 0.0
        %666 = vmatprep.subr.mxu0 0.0
        %667 = vmatpush1.msra.mxu0 0.0
        %668 = vmatprep.subr.mxu0 0.0
        %669 = vmatpush1.msra.mxu0 0.0
        %670 = vmatprep.subr.mxu0 0.0
        %671 = vmatpush1.msra.mxu0 0.0
        %672 = vmatprep.subr.mxu0 0.0
        %673 = vmatpush1.msra.mxu0 0.0
        %674 = vmatprep.subr.mxu0 0.0
        %675 = vmatpush1.msra.mxu0 0.0
        %676 = vmatprep.mubr.f32.mxu0 0.0
        %677 = vmatmul.mubr.f32.gmra.mrb[0].mxu0 %v610
        %v678 = vpop.f32.mrb[0].mxu0
        %v679 = vadd.f32 %v607, %v678
        %v680 = vpop.f32.mrb[0].mxu0
        %681 = vdwg.mxu0
        %v682 = vld [vmem:[%s7] sm:$0xff]
        %v683 = vld [vmem:[%s7 + $0x8] sm:$0xff]
        %v684 = vld [vmem:[%s7 + $0x10] sm:$0xff]
        %v685 = vld [vmem:[%s7 + $0x18] sm:$0xff]
        %v686 = vld [vmem:[%s8] sm:$0xf]
        %v688 = vsel %vm523, %v679, 0
        %690 = vmatprep.subr.mxu0 0.0
        %691 = vmatpush1.msra.mxu0 %v682
        %692 = vmatprep.subr.mxu0 0.0
        %693 = vmatpush1.msra.mxu0 %v683
        %694 = vmatprep.subr.mxu0 0.0
        %695 = vmatpush1.msra.mxu0 %v684
        %696 = vmatprep.subr.mxu0 0.0
        %697 = vmatpush1.msra.mxu0 %v685
        %698 = vmatprep.subr.mxu0 0.0
        %699 = vmatpush1.msra.mxu0 0.0
        %700 = vmatprep.subr.mxu0 0.0
        %701 = vmatpush1.msra.mxu0 0.0
        %702 = vmatprep.subr.mxu0 0.0
        %703 = vmatpush1.msra.mxu0 0.0
        %704 = vmatprep.subr.mxu0 0.0
        %705 = vmatpush1.msra.mxu0 0.0
        %706 = vmatprep.subr.mxu0 0.0
        %707 = vmatpush1.msra.mxu0 0.0
        %708 = vmatprep.subr.mxu0 0.0
        %709 = vmatpush1.msra.mxu0 0.0
        %710 = vmatprep.subr.mxu0 0.0
        %711 = vmatpush1.msra.mxu0 0.0
        %712 = vmatprep.subr.mxu0 0.0
        %713 = vmatpush1.msra.mxu0 0.0
        %714 = vmatprep.subr.mxu0 0.0
        %715 = vmatpush1.msra.mxu0 0.0
        %716 = vmatprep.subr.mxu0 0.0
        %717 = vmatpush1.msra.mxu0 0.0
        %718 = vmatprep.subr.mxu0 0.0
        %719 = vmatpush1.msra.mxu0 0.0
        %720 = vmatprep.subr.mxu0 0.0
        %721 = vmatpush1.msra.mxu0 0.0
        %722 = vmatprep.subr.mxu0 0.0
        %723 = vmatpush1.msra.mxu0 0.0
        %724 = vmatprep.subr.mxu0 0.0
        %725 = vmatpush1.msra.mxu0 0.0
        %726 = vmatprep.subr.mxu0 0.0
        %727 = vmatpush1.msra.mxu0 0.0
        %728 = vmatprep.subr.mxu0 0.0
        %729 = vmatpush1.msra.mxu0 0.0
        %730 = vmatprep.subr.mxu0 0.0
        %731 = vmatpush1.msra.mxu0 0.0
        %732 = vmatprep.subr.mxu0 0.0
        %733 = vmatpush1.msra.mxu0 0.0
        %734 = vmatprep.subr.mxu0 0.0
        %735 = vmatpush1.msra.mxu0 0.0
        %736 = vmatprep.subr.mxu0 0.0
        %737 = vmatpush1.msra.mxu0 0.0
        %738 = vmatprep.subr.mxu0 0.0
        %739 = vmatpush1.msra.mxu0 0.0
        %740 = vmatprep.subr.mxu0 0.0
        %741 = vmatpush1.msra.mxu0 0.0
        %742 = vmatprep.subr.mxu0 0.0
        %743 = vmatpush1.msra.mxu0 0.0
        %744 = vmatprep.subr.mxu0 0.0
        %745 = vmatpush1.msra.mxu0 0.0
        %746 = vmatprep.subr.mxu0 0.0
        %747 = vmatpush1.msra.mxu0 0.0
        %748 = vmatprep.subr.mxu0 0.0
        %749 = vmatpush1.msra.mxu0 0.0
        %750 = vmatprep.subr.mxu0 0.0
        %751 = vmatpush1.msra.mxu0 0.0
        %752 = vmatprep.subr.mxu0 0.0
        %753 = vmatpush1.msra.mxu0 0.0
        %754 = vmatprep.mubr.f32.mxu0 0.0
        %755 = vmatmul.mubr.f32.gmra.mrb[0].mxu0 %v688
        %v756 = vpop.f32.mrb[0].mxu0
        %v757 = vadd.f32 0.0, %v756
        %v758 = vpop.f32.mrb[0].mxu0
        %759 = vdwg.mxu0
        %v760 = vmul.f32 %v757, 0.125
        %vm761 = vcmask 31744
        %v763 = vsel %vm761, %v760, 0
        %vm765 = vcmask 1043456
        %v767 = vsel %vm765, %v686, 0
        %769 = vmatprep.subr.mxu0 0.0
        %770 = vmatpush1.msra.mxu0 %v767
        %771 = vmatprep.subr.mxu0 0.0
        %772 = vmatpush1.msra.mxu0 0.0
        %773 = vmatprep.subr.mxu0 0.0
        %774 = vmatpush1.msra.mxu0 0.0
        %775 = vmatprep.subr.mxu0 0.0
        %776 = vmatpush1.msra.mxu0 0.0
        %777 = vmatprep.subr.mxu0 0.0
        %778 = vmatpush1.msra.mxu0 0.0
        %779 = vmatprep.subr.mxu0 0.0
        %780 = vmatpush1.msra.mxu0 0.0
        %781 = vmatprep.subr.mxu0 0.0
        %782 = vmatpush1.msra.mxu0 0.0
        %783 = vmatprep.subr.mxu0 0.0
        %784 = vmatpush1.msra.mxu0 0.0
        %785 = vmatprep.subr.mxu0 0.0
        %786 = vmatpush1.msra.mxu0 0.0
        %787 = vmatprep.subr.mxu0 0.0
        %788 = vmatpush1.msra.mxu0 0.0
        %789 = vmatprep.subr.mxu0 0.0
        %790 = vmatpush1.msra.mxu0 0.0
        %791 = vmatprep.subr.mxu0 0.0
        %792 = vmatpush1.msra.mxu0 0.0
        %793 = vmatprep.subr.mxu0 0.0
        %794 = vmatpush1.msra.mxu0 0.0
        %795 = vmatprep.subr.mxu0 0.0
        %796 = vmatpush1.msra.mxu0 0.0
        %797 = vmatprep.subr.mxu0 0.0
        %798 = vmatpush1.msra.mxu0 0.0
        %799 = vmatprep.subr.mxu0 0.0
        %800 = vmatpush1.msra.mxu0 0.0
        %801 = vmatprep.subr.mxu0 0.0
        %802 = vmatpush1.msra.mxu0 0.0
        %803 = vmatprep.subr.mxu0 0.0
        %804 = vmatpush1.msra.mxu0 0.0
        %805 = vmatprep.subr.mxu0 0.0
        %806 = vmatpush1.msra.mxu0 0.0
        %807 = vmatprep.subr.mxu0 0.0
        %808 = vmatpush1.msra.mxu0 0.0
        %809 = vmatprep.subr.mxu0 0.0
        %810 = vmatpush1.msra.mxu0 0.0
        %811 = vmatprep.subr.mxu0 0.0
        %812 = vmatpush1.msra.mxu0 0.0
        %813 = vmatprep.subr.mxu0 0.0
        %814 = vmatpush1.msra.mxu0 0.0
        %815 = vmatprep.subr.mxu0 0.0
        %816 = vmatpush1.msra.mxu0 0.0
        %817 = vmatprep.subr.mxu0 0.0
        %818 = vmatpush1.msra.mxu0 0.0
        %819 = vmatprep.subr.mxu0 0.0
        %820 = vmatpush1.msra.mxu0 0.0
        %821 = vmatprep.subr.mxu0 0.0
        %822 = vmatpush1.msra.mxu0 0.0
        %823 = vmatprep.subr.mxu0 0.0
        %824 = vmatpush1.msra.mxu0 0.0
        %825 = vmatprep.subr.mxu0 0.0
        %826 = vmatpush1.msra.mxu0 0.0
        %827 = vmatprep.subr.mxu0 0.0
        %828 = vmatpush1.msra.mxu0 0.0
        %829 = vmatprep.subr.mxu0 0.0
        %830 = vmatpush1.msra.mxu0 0.0
        %831 = vmatprep.subr.mxu0 0.0
        %832 = vmatpush1.msra.mxu0 0.0
        %833 = vmatprep.mubr.f32.mxu0 0.0
        %834 = vmatmul.mubr.f32.gmra.mrb[0].mxu0 %v763
        %v835 = vpop.f32.mrb[0].mxu0
        %v836 = vadd.f32 0.0, %v835
        %v837 = vpop.f32.mrb[0].mxu0
        %838 = vdwg.mxu0
        %v839 = vsub.f32 %v679, %v836
        %v840 = vmul.f32 %v839, %v839
        %v842 = vsel %vm523, %v840, 0
        %844 = vmatprep.subr.mxu0 0.0
        %845 = vmatpush1.msra.mxu0 %v682
        %846 = vmatprep.subr.mxu0 0.0
        %847 = vmatpush1.msra.mxu0 %v683
        %848 = vmatprep.subr.mxu0 0.0
        %849 = vmatpush1.msra.mxu0 %v684
        %850 = vmatprep.subr.mxu0 0.0
        %851 = vmatpush1.msra.mxu0 %v685
        %852 = vmatprep.subr.mxu0 0.0
        %853 = vmatpush1.msra.mxu0 0.0
        %854 = vmatprep.subr.mxu0 0.0
        %855 = vmatpush1.msra.mxu0 0.0
        %856 = vmatprep.subr.mxu0 0.0
        %857 = vmatpush1.msra.mxu0 0.0
        %858 = vmatprep.subr.mxu0 0.0
        %859 = vmatpush1.msra.mxu0 0.0
        %860 = vmatprep.subr.mxu0 0.0
        %861 = vmatpush1.msra.mxu0 0.0
        %862 = vmatprep.subr.mxu0 0.0
        %863 = vmatpush1.msra.mxu0 0.0
        %864 = vmatprep.subr.mxu0 0.0
        %865 = vmatpush1.msra.mxu0 0.0
        %866 = vmatprep.subr.mxu0 0.0
        %867 = vmatpush1.msra.mxu0 0.0
        %868 = vmatprep.subr.mxu0 0.0
        %869 = vmatpush1.msra.mxu0 0.0
        %870 = vmatprep.subr.mxu0 0.0
        %871 = vmatpush1.msra.mxu0 0.0
        %872 = vmatprep.subr.mxu0 0.0
        %873 = vmatpush1.msra.mxu0 0.0
        %874 = vmatprep.subr.mxu0 0.0
        %875 = vmatpush1.msra.mxu0 0.0
        %876 = vmatprep.subr.mxu0 0.0
        %877 = vmatpush1.msra.mxu0 0.0
        %878 = vmatprep.subr.mxu0 0.0
        %879 = vmatpush1.msra.mxu0 0.0
        %880 = vmatprep.subr.mxu0 0.0
        %881 = vmatpush1.msra.mxu0 0.0
        %882 = vmatprep.subr.mxu0 0.0
        %883 = vmatpush1.msra.mxu0 0.0
        %884 = vmatprep.subr.mxu0 0.0
        %885 = vmatpush1.msra.mxu0 0.0
        %886 = vmatprep.subr.mxu0 0.0
        %887 = vmatpush1.msra.mxu0 0.0
        %888 = vmatprep.subr.mxu0 0.0
        %889 = vmatpush1.msra.mxu0 0.0
        %890 = vmatprep.subr.mxu0 0.0
        %891 = vmatpush1.msra.mxu0 0.0
        %892 = vmatprep.subr.mxu0 0.0
        %893 = vmatpush1.msra.mxu0 0.0
        %894 = vmatprep.subr.mxu0 0.0
        %895 = vmatpush1.msra.mxu0 0.0
        %896 = vmatprep.subr.mxu0 0.0
        %897 = vmatpush1.msra.mxu0 0.0
        %898 = vmatprep.subr.mxu0 0.0
        %899 = vmatpush1.msra.mxu0 0.0
        %900 = vmatprep.subr.mxu0 0.0
        %901 = vmatpush1.msra.mxu0 0.0
        %902 = vmatprep.subr.mxu0 0.0
        %903 = vmatpush1.msra.mxu0 0.0
        %904 = vmatprep.subr.mxu0 0.0
        %905 = vmatpush1.msra.mxu0 0.0
        %906 = vmatprep.subr.mxu0 0.0
        %907 = vmatpush1.msra.mxu0 0.0
        %908 = vmatprep.mubr.f32.mxu0 0.0
        %909 = vmatmul.mubr.f32.gmra.mrb[0].mxu0 %v842
        %v910 = vpop.f32.mrb[0].mxu0
        %v911 = vadd.f32 0.0, %v910
        %v912 = vpop.f32.mrb[0].mxu0
        %913 = vdwg.mxu0
        %v914 = vmul.f32 %v911, 0.125
        %v915 = vadd.f32 %v914, 1e-05
        %v916 = vrsqrt.pop %v915
        %v918 = vsel %vm761, %v916, 0
        %920 = vmatprep.subr.mxu0 0.0
        %921 = vmatpush1.msra.mxu0 %v767
        %922 = vmatprep.subr.mxu0 0.0
        %923 = vmatpush1.msra.mxu0 0.0
        %924 = vmatprep.subr.mxu0 0.0
        %925 = vmatpush1.msra.mxu0 0.0
        %926 = vmatprep.subr.mxu0 0.0
        %927 = vmatpush1.msra.mxu0 0.0
        %928 = vmatprep.subr.mxu0 0.0
        %929 = vmatpush1.msra.mxu0 0.0
        %930 = vmatprep.subr.mxu0 0.0
        %931 = vmatpush1.msra.mxu0 0.0
        %932 = vmatprep.subr.mxu0 0.0
        %933 = vmatpush1.msra.mxu0 0.0
        %934 = vmatprep.subr.mxu0 0.0
        %935 = vmatpush1.msra.mxu0 0.0
        %936 = vmatprep.subr.mxu0 0.0
        %937 = vmatpush1.msra.mxu0 0.0
        %938 = vmatprep.subr.mxu0 0.0
        %939 = vmatpush1.msra.mxu0 0.0
        %940 = vmatprep.subr.mxu0 0.0
        %941 = vmatpush1.msra.mxu0 0.0
        %942 = vmatprep.subr.mxu0 0.0
        %943 = vmatpush1.msra.mxu0 0.0
        %944 = vmatprep.subr.mxu0 0.0
        %945 = vmatpush1.msra.mxu0 0.0
        %946 = vmatprep.subr.mxu0 0.0
        %947 = vmatpush1.msra.mxu0 0.0
        %948 = vmatprep.subr.mxu0 0.0
        %949 = vmatpush1.msra.mxu0 0.0
        %950 = vmatprep.subr.mxu0 0.0
        %951 = vmatpush1.msra.mxu0 0.0
        %952 = vmatprep.subr.mxu0 0.0
        %953 = vmatpush1.msra.mxu0 0.0
        %954 = vmatprep.subr.mxu0 0.0
        %955 = vmatpush1.msra.mxu0 0.0
        %956 = vmatprep.subr.mxu0 0.0
        %957 = vmatpush1.msra.mxu0 0.0
        %958 = vmatprep.subr.mxu0 0.0
        %959 = vmatpush1.msra.mxu0 0.0
        %960 = vmatprep.subr.mxu0 0.0
        %961 = vmatpush1.msra.mxu0 0.0
        %962 = vmatprep.subr.mxu0 0.0
        %963 = vmatpush1.msra.mxu0 0.0
        %964 = vmatprep.subr.mxu0 0.0
        %965 = vmatpush1.msra.mxu0 0.0
        %966 = vmatprep.subr.mxu0 0.0
        %967 = vmatpush1.msra.mxu0 0.0
        %968 = vmatprep.subr.mxu0 0.0
        %969 = vmatpush1.msra.mxu0 0.0
        %970 = vmatprep.subr.mxu0 0.0
        %971 = vmatpush1.msra.mxu0 0.0
        %972 = vmatprep.subr.mxu0 0.0
        %973 = vmatpush1.msra.mxu0 0.0
        %974 = vmatprep.subr.mxu0 0.0
        %975 = vmatpush1.msra.mxu0 0.0
        %976 = vmatprep.subr.mxu0 0.0
        %977 = vmatpush1.msra.mxu0 0.0
        %978 = vmatprep.subr.mxu0 0.0
        %979 = vmatpush1.msra.mxu0 0.0
        %980 = vmatprep.subr.mxu0 0.0
        %981 = vmatpush1.msra.mxu0 0.0
        %982 = vmatprep.subr.mxu0 0.0
        %983 = vmatpush1.msra.mxu0 0.0
        %984 = vmatprep.mubr.f32.mxu0 0.0
        %985 = vmatmul.mubr.f32.gmra.mrb[0].mxu0 %v918
        %v986 = vpop.f32.mrb[0].mxu0
        %v987 = vadd.f32 0.0, %v986
        %v988 = vpop.f32.mrb[0].mxu0
        %989 = vdwg.mxu0
        %v990 = vmul.f32 %v839, %v987
        %v991 = vld [vmem:[%s5] sm:$0x1]
        %v993 = vlaneseq
        %v994 = vshrl.u32 %v993, 7
        %v995 = vsub.s32 0, %v994
        %v996 = vrot.slane %v991, %v995
        %v998 = vmul.f32 %v990, %v996
        %v999 = vld [vmem:[%s6] sm:$0x1]
        %v1001 = vlaneseq
        %v1002 = vshrl.u32 %v1001, 7
        %v1003 = vsub.s32 0, %v1002
        %v1004 = vrot.slane %v999, %v1003
        %v1006 = vadd.f32 %v998, %v1004
        %v1007 = vmax.f32 %v1006, 0.0
        %1008 = vst.msk [vmem:[%s471] sm:$0xff] %vm523, %v1007
        %1009 = vrot.lane.b32.xlu0 %v679, 96
        %v1010 = vpop.permute.xlu0 %1009
        %vm1012 = vcmask 80896
        %1013 = vst.msk [vmem:[%s502] sm:$0xff] %vm1012, %v1010
        %1014 = vrot.lane.b32.xlu0 %v679, 86
        %v1015 = vpop.permute.xlu0 %1014
        %vm1017 = vcmask 7168
        %1018 = vst.msk [vmem:[%s510] sm:$0xff] %vm1017, %v1015
        %s1019 = sand.u32 %s258, 1
        %s1020 = scalar_lea.sflag [#allocation4], %s1019
        %s1021 = sand.u32 %s258, 1
        %s1022 = smul.addr %s1021, 8
        %s1023 = scalar_lea.vmem [#allocation7], %s1022
        %p1024 = scmp.lt.s32.totalorder %s37, 7
        %s1025 = scalar_select %p1024, %s37, 7
        %p1026 = scmp.lt.s32.totalorder %s36, 1
        %s1027 = scalar_select %p1026, %s36, 1
        %s1028 = smul.addr %s1025, 2
        %s1029 = sadd.s32 %s1027, %s1028
        %s1030 = smul.addr %s1029, 8
        %s1031 = scalar_lea.vmem %s10, %s1030
        %p1032 = scmp.lt.s32.totalorder %s37, 7
        %s1033 = scalar_select %p1032, %s37, 7
        %p1034 = scmp.lt.s32.totalorder %s36, 1
        %s1035 = scalar_select %p1034, %s36, 1
        %s1036 = smul.addr %s1033, 2
        %s1037 = sadd.s32 %s1035, %s1036
        %s1038 = smul.addr %s1037, 8
        %s1039 = scalar_lea.vmem %s11, %s1038
        // Predicated region
        $region65: #{tpu_custom_call.1} parent=55 // pred_check
          %p1040 = pneg %p268
        $region66: #{tpu_custom_call.1} parent=55 // pred_check_branch
          %1042 = sbr.rel (%p1040) target = $region68
        $region67: #{tpu_custom_call.1} parent=55 // pred_region
          %s1044 = ssub.s32 128, 128
          %1045 = vsyncadd %s1020, %s1044
          %s1046 = smul.addr %s37, 2
          %s1047 = sadd.s32 %s36, %s1046
          %s1048 = smul.addr %s1047, 128
          %s1049 = scalar_lea.hbm %s9, %s1048
          %s1051 = sshll.u32 %s1023, 4
          %s1052 = int_to_ptr.vmem [resolvable:$true] %s1051
          %1054 = dma.vmem_to_hbm [thread:$0]  %s1052, 128, %s1049, %s1020
        $region68: #{tpu_custom_call.1} parent=55 // pred_fallthru
          _
        // Predicated region
        $region69: #{tpu_custom_call.1} parent=55 // pred_check
          %p1055 = pneg %p296
        $region70: #{tpu_custom_call.1} parent=55 // pred_check_branch
          %1057 = sbr.rel (%p1055) target = $region72
        $region71: #{tpu_custom_call.1} parent=55 // pred_region
          _
        $region72: #{tpu_custom_call.1} parent=55 // pred_fallthru
          _
        // Predicated region
        $region73: #{tpu_custom_call.1} parent=55 // pred_check
          %p1058 = pneg %p324
        $region74: #{tpu_custom_call.1} parent=55 // pred_check_branch
          %1060 = sbr.rel (%p1058) target = $region76
        $region75: #{tpu_custom_call.1} parent=55 // pred_region
          _
        $region76: #{tpu_custom_call.1} parent=55 // pred_fallthru
          _
      $region56: #{tpu_custom_call.1} parent=5 // pred_fallthru
        _
      %p1061 = scmp.le.s32.totalorder 2, %s27
      // Predicated region
      $region77: #{tpu_custom_call.1} parent=5 // pred_check
        %p1062 = pneg %p1061
      $region78: #{tpu_custom_call.1} parent=5 // pred_check_branch
        %1064 = sbr.rel (%p1062) target = $region80
      $region79: #{tpu_custom_call.1} parent=5 // pred_region
        %s1065 = ssub.s32 %s27, 2
        // Predicated region
        $region81: #{tpu_custom_call.1} parent=79 // pred_check
          %p1066 = pneg %p274
        $region82: #{tpu_custom_call.1} parent=79 // pred_check_branch
          %1068 = sbr.rel (%p1066) target = $region84
        $region83: #{tpu_custom_call.1} parent=79 // pred_region
          %s1069 = sand.u32 %s259, 1
          %s1070 = scalar_lea.sflag [#allocation4], %s1069
          %s1071 = sand.u32 %s259, 1
          %s1072 = smul.addr %s1071, 8
          %s1073 = scalar_lea.vmem [#allocation7], %s1072
          %1074 = dma.done %s1070, 128
        $region84: #{tpu_custom_call.1} parent=79 // pred_fallthru
          _
        // Predicated region
        $region85: #{tpu_custom_call.1} parent=79 // pred_check
          %p1075 = pneg %p302
        $region86: #{tpu_custom_call.1} parent=79 // pred_check_branch
          %1077 = sbr.rel (%p1075) target = $region88
        $region87: #{tpu_custom_call.1} parent=79 // pred_region
          %p1078 = scmp.lt.s32.totalorder %s39, 7
          %s1079 = scalar_select %p1078, %s39, 7
          %p1080 = scmp.lt.s32.totalorder %s38, 1
          %s1081 = scalar_select %p1080, %s38, 1
          %s1082 = smul.addr %s1079, 2
          %s1083 = sadd.s32 %s1081, %s1082
          %s1084 = smul.addr %s1083, 8
          %s1085 = scalar_lea.vmem %s10, %s1084
        $region88: #{tpu_custom_call.1} parent=79 // pred_fallthru
          _
        // Predicated region
        $region89: #{tpu_custom_call.1} parent=79 // pred_check
          %p1086 = pneg %p330
        $region90: #{tpu_custom_call.1} parent=79 // pred_check_branch
          %1088 = sbr.rel (%p1086) target = $region92
        $region91: #{tpu_custom_call.1} parent=79 // pred_region
          %p1089 = scmp.lt.s32.totalorder %s39, 7
          %s1090 = scalar_select %p1089, %s39, 7
          %p1091 = scmp.lt.s32.totalorder %s38, 1
          %s1092 = scalar_select %p1091, %s38, 1
          %s1093 = smul.addr %s1090, 2
          %s1094 = sadd.s32 %s1092, %s1093
          %s1095 = smul.addr %s1094, 8
          %s1096 = scalar_lea.vmem %s11, %s1095
        $region92: #{tpu_custom_call.1} parent=79 // pred_fallthru
          _
      $region80: #{tpu_custom_call.1} parent=5 // pred_fallthru
        _
    $region6: #{tpu_custom_call.1} parent=1 // loop_footer
      %s31 = sadd.s32 1, %s27
    $region7: #{tpu_custom_call.1} parent=1 // loop_footer_branch
      %26 = sbr.rel target = $region3
    $region8: #{tpu_custom_call.1} parent=1 // loop_exit
      _
    %1097 = vsyncpa [#allocation3], 1
    %s1098 = scalar_lea.sflag [#allocation3], 1
    %1099 = vsyncpa %s1098, 1
    %1100 = vsyncpa [#allocation6], 1
    %s1101 = scalar_lea.sflag [#allocation6], 1
    %1102 = vsyncpa %s1101, 1
    %1103 = vsyncpa [#allocation4], 1
    %s1104 = scalar_lea.sflag [#allocation4], 1
    %1105 = vsyncpa %s1104, 1

</llo_original>
